<compile_context>
chip_gen: v7x
topology: tpu7x:2x2x1
jax: 0.10.0
libtpu: 0.0.40
codegen_flags: <defaults>
</compile_context>

<pallas_src>
import functools

import jax
import jax.numpy as jnp
from jax.experimental import pallas as pl
from jax.experimental.pallas import tpu as pltpu

POOL = 64
TARGET = 0.6


def _lexp_kernel(x_ref, ones_ref, o_ref, *, pool, target, pw):
    # x_ref: (PB, TILE_H, W) in the input dtype; cast to f32 in VMEM.
    x = x_ref[...].astype(jnp.float32)
    pb, tile_h, w = x.shape
    r = pb * (tile_h // pool)

    # (1) Row band-sum: (PB, TILE_H, W) -> (R, 64, W) -> (R, W).
    #     64 is a multiple of the sublane tile (8) and W a multiple of 128, so
    #     the reshape is layout-preserving; the reduction is VPU adds.
    band = x.reshape(r, pool, w).sum(axis=1)

    # (2) Column reduction: one MXU matmul against the static block-ones
    #     matrix (W, pw_pad).  HIGHEST precision keeps the f32 sums exact
    #     enough (the matmul is tiny compared to the band sum).
    sums = jnp.dot(band, ones_ref[...],
                   preferred_element_type=jnp.float32,
                   precision=jax.lax.Precision.HIGHEST)      # (R, pw_pad)

    pooled = sums * (1.0 / float(pool * pool))
    diff = pooled - jnp.float32(target)
    sq = diff * diff

    # Zero the padded lanes (>= pw): they came from all-zero columns of the
    # ones matrix and would otherwise contribute target**2.
    lane = jax.lax.broadcasted_iota(jnp.int32, sq.shape, dimension=1)
    sq = jnp.where(lane < pw, sq, jnp.float32(0.0))

    # Per-step lane-dense partial result; no cross-lane reduce in the kernel.
    o_ref[...] = sq.reshape(o_ref.shape)


def lexp(iscb, *, pool=POOL, target=TARGET, target_block_bytes=2 << 20):
    """Pallas TPU implementation of LExp.forward (returns a float32 scalar)."""
    n, c, h, w = iscb.shape
    assert h % pool == 0 and w % pool == 0, "H, W must be multiples of 64"
    assert w % 128 == 0, "W must be lane-aligned (multiple of 128)"

    ph, pw = h // pool, w // pool
    pw_pad = max(128, ((pw + 127) // 128) * 128)
    planes = n * c
    itemsize = jnp.dtype(iscb.dtype).itemsize
    plane_bytes = h * w * itemsize

    # Choose the per-step block: batch whole planes if a plane is small,
    # otherwise tile a single plane along H (multiples of 64).
    if plane_bytes <= target_block_bytes:
        tile_h = h
        pb = 1
        for d in range(planes, 0, -1):
            if planes % d == 0 and d * plane_bytes <= target_block_bytes:
                pb = d
                break
    else:
        pb = 1
        tile_h = pool
        for d in range(h // pool, 0, -1):
            t = d * pool
            if h % t == 0 and t * w * itemsize <= target_block_bytes:
                tile_h = t
                break

    num_pc = planes // pb           # grid axis 0: plane batches
    num_h = h // tile_h             # grid axis 1: H bands
    r = pb * (tile_h // pool)       # pooled rows produced per grid step

    # Keep the HBM copy in the input dtype (no wrapper-side f32 cast).
    x_flat = iscb.reshape(planes, h, w)

    # Static block-ones matrix: column j sums lanes [j*pool, (j+1)*pool).
    win = jnp.arange(w, dtype=jnp.int32) // pool
    lanes = jnp.arange(pw_pad, dtype=jnp.int32)
    ones_mat = (win[:, None] == lanes[None, :]).astype(jnp.float32)  # (W, pw_pad)

    kernel = functools.partial(_lexp_kernel, pool=pool, target=target, pw=pw)

    out_shape = jax.ShapeDtypeStruct((num_pc, num_h, r, pw_pad), jnp.float32)
    out_bytes = num_pc * num_h * r * pw_pad * 4
    cost = pl.CostEstimate(
        flops=2 * planes * h * w,
        transcendentals=0,
        bytes_accessed=planes * h * w * itemsize + w * pw_pad * 4 + out_bytes)

    out = pl.pallas_call(
        kernel,
        out_shape=out_shape,
        grid_spec=pltpu.PrefetchScalarGridSpec(
            num_scalar_prefetch=0,
            grid=(num_pc, num_h),
            in_specs=[
                pl.BlockSpec((pb, tile_h, w), lambda i, j: (i, j, 0)),
                pl.BlockSpec((w, pw_pad), lambda i, j: (0, 0)),
            ],
            out_specs=pl.BlockSpec((1, 1, r, pw_pad), lambda i, j: (i, j, 0, 0)),
        ),
        compiler_params=pltpu.CompilerParams(
            dimension_semantics=("parallel", "parallel")),
        cost_estimate=cost,
    )(x_flat, ones_mat)

    total_pooled = planes * ph * pw
    # Divide by the number of pooled values exactly once.
    return jnp.sum(out) / jnp.float32(total_pooled)


def lexp_ref(iscb, *, pool=POOL, target=TARGET):
    """Pure-JAX reference (mirrors torch AvgPool2d(64) + mean of squared err)."""
    n, c, h, w = iscb.shape
    ph, pw = h // pool, w // pool
    x = iscb.reshape(n, c, ph, pool, pw, pool)
    pooled = jnp.mean(x.astype(jnp.float32), axis=(3, 5))
    return jnp.mean((pooled - target) ** 2)


if __name__ == "__main__":
    key = jax.random.PRNGKey(0)
    # Small shape consistent with the module: AvgPool2d(64) needs H, W >= 64.
    x = jax.random.uniform(key, (2, 3, 128, 128), dtype=jnp.float32)

    out = jax.block_until_ready(lexp(x))
    ref = jax.block_until_ready(lexp_ref(x))

    assert jnp.allclose(out, ref, rtol=1e-4, atol=1e-6), (out, ref)
    print("KERNEL_OK")
</pallas_src>

<mosaic_0001>
module attributes {stable_mosaic.version = 11 : i64} {
  func.func @_lexp_kernel(%arg0: i32, %arg1: i32, %arg2: memref<6x128x128xf32, #tpu.memory_space<vmem>>, %arg3: memref<128x128xf32, #tpu.memory_space<vmem>>, %arg4: memref<1x1x12x128xf32, #tpu.memory_space<vmem>>) attributes {dimension_semantics = [#tpu.dimension_semantics<parallel>, #tpu.dimension_semantics<parallel>], iteration_bounds = array<i64: 1, 1>, scalar_prefetch = 0 : i64, scratch_operands = 0 : i64, tpu.core_type = #tpu.core_type<tc>, window_params = [{transform_indices = @transform_0, window_bounds = array<i64: 6, 128, 128>}, {pipeline_mode = #tpu.pipeline_mode<synchronous>, transform_indices = @transform_1, window_bounds = array<i64: 128, 128>}, {transform_indices = @transform_2, window_bounds = array<i64: 1, 1, 12, 128>}]} {
    %c0 = arith.constant 0 : index
    %c0_0 = arith.constant 0 : index
    %c0_1 = arith.constant 0 : index
    %0 = vector.load %arg2[%c0, %c0_0, %c0_1] : memref<6x128x128xf32, #tpu.memory_space<vmem>>, vector<6x128x128xf32>
    %1 = vector.shape_cast %0 : vector<6x128x128xf32> to vector<12x64x128xf32>
    %cst = arith.constant dense<0.000000e+00> : vector<12x128xf32>
    %2 = vector.multi_reduction <add>, %1, %cst [1] : vector<12x64x128xf32> to vector<12x128xf32>
    %c0_2 = arith.constant 0 : index
    %c0_3 = arith.constant 0 : index
    %3 = vector.load %arg3[%c0_2, %c0_3] : memref<128x128xf32, #tpu.memory_space<vmem>>, vector<128x128xf32>
    %cst_4 = arith.constant dense<0.000000e+00> : vector<12x128xf32>
    %4 = tpu.matmul %2, %3, %cst_4 {dimension_numbers = #tpu.dot_dimension_numbers<[1], [0], [0], [1], [0, 0, 1, 1], [], []>, precision = #tpu.contract_precision<fp32>} : vector<12x128xf32>, vector<128x128xf32>, vector<12x128xf32> -> vector<12x128xf32>
    %cst_5 = arith.constant 2.44140625E-4 : f32
    %5 = vector.broadcast %cst_5 : f32 to vector<12x128xf32>
    %6 = arith.mulf %4, %5 : vector<12x128xf32>
    %cst_6 = arith.constant 6.000000e-01 : f32
    %7 = vector.broadcast %cst_6 : f32 to vector<12x128xf32>
    %8 = arith.subf %6, %7 : vector<12x128xf32>
    %9 = arith.mulf %8, %8 : vector<12x128xf32>
    %10 = tpu.iota {dimensions = array<i32: 1>} : vector<12x128xi32>
    %c2_i32 = arith.constant 2 : i32
    %11 = vector.broadcast %c2_i32 : i32 to vector<12x128xi32>
    %12 = arith.cmpi slt, %10, %11 : vector<12x128xi32>
    %cst_7 = arith.constant 0.000000e+00 : f32
    %13 = vector.broadcast %cst_7 : f32 to vector<12x128xf32>
    %14 = arith.select %12, %9, %13 : vector<12x128xi1>, vector<12x128xf32>
    %15 = vector.shape_cast %14 : vector<12x128xf32> to vector<1x1x12x128xf32>
    %c0_8 = arith.constant 0 : index
    %c0_9 = arith.constant 0 : index
    %c0_10 = arith.constant 0 : index
    %c0_11 = arith.constant 0 : index
    %16 = vector.load %arg4[%c0_8, %c0_9, %c0_10, %c0_11] : memref<1x1x12x128xf32, #tpu.memory_space<vmem>>, vector<1x1x12x128xf32>
    tpu.vector_store %arg4[%c0_8, %c0_9, %c0_10, %c0_11], %15 {strides = array<i32>} : memref<1x1x12x128xf32, #tpu.memory_space<vmem>>, vector<1x1x12x128xf32>,
    return
  }
  func.func @transform_0(%arg0: i32, %arg1: i32) -> (i32, i32, i32) {
    %c0_i32 = arith.constant 0 : i32
    %c0_i32_0 = arith.constant 0 : i32
    return %arg0, %arg1, %c0_i32 : i32, i32, i32
  }
  func.func @transform_1(%arg0: i32, %arg1: i32) -> (i32, i32) {
    %c0_i32 = arith.constant 0 : i32
    %c0_i32_0 = arith.constant 0 : i32
    %c0_i32_1 = arith.constant 0 : i32
    return %c0_i32, %c0_i32_0 : i32, i32
  }
  func.func @transform_2(%arg0: i32, %arg1: i32) -> (i32, i32, i32, i32) {
    %c0_i32 = arith.constant 0 : i32
    %c0_i32_0 = arith.constant 0 : i32
    %c0_i32_1 = arith.constant 0 : i32
    return %arg0, %arg1, %c0_i32, %c0_i32_0 : i32, i32, i32, i32
  }
}

</mosaic_0001>

<llo_original>
// kernel: tpu_custom_call.1
$region0: #{tpu_custom_call.1}
  #allocation0 [shape = 'u32[]', space=smem, size = 0x4, offset = 0x4, fixed_abs, tag = 'smem constant byte address 0x4 - core index']
  #allocation1 [shape = 'u32[144,128]{1,0:T(1,128)}', space=vmem, size = 0x12000, scoped, tag = 'internal scratch']
  %s0 = inlined_call_operand.hbm [shape: f32[6,128,128], index: 0, kind: input, shape index: {}]
  %s1 = inlined_call_operand.hbm [shape: f32[128,128], index: 1, kind: input, shape index: {}]
  %s2 = inlined_call_operand.vmem [shape: f32[1,1,12,128], index: 2, kind: output, shape index: {}]
  %s3 = sld [smem:[#allocation0]]
  $region26: #{tpu_custom_call.1} parent=0
    _
  %s5 = ssub.s32 1, %s3
  %s6 = scalar_select 0, %s5, %s3
  $region1: #{tpu_custom_call.1} parent=0
    #allocation2 [shape = 'u8[393216]{0}', space=vmem, size = 0x60000, scoped, tag = 'input window, operand 0, single buffered']
    #allocation3 [shape = 's32[1]{0}', space=sflag, size = 0x4, scoped, tag = 'scoped memory for tpu_custom_call.1']
    #allocation4 [shape = 'u8[65536]{0}', space=vmem, size = 0x10000, scoped, tag = 'input window, operand 1, single buffered']
    #allocation5 [shape = 's32[1]{0}', space=sflag, size = 0x4, scoped, tag = 'scoped memory for tpu_custom_call.1']
    %7 = vsyncpa [#allocation3], 0
    %8 = vsyncpa [#allocation5], 0
    // Predicated region
    $region2: #{tpu_custom_call.1} parent=1 // pred_check
      _
    $region3: #{tpu_custom_call.1} parent=1 // pred_check_branch
      %10 = sbr.rel (0) target = $region5
    $region4: #{tpu_custom_call.1} parent=1 // pred_region
      %s12 = ssub.s32 12288, 12288
      %13 = vsyncadd [#allocation3], %s12
      %s14 = sshll.u32 [#allocation2], 4
      %s15 = int_to_ptr.vmem [resolvable:$true] %s14
      %20 = dma.hbm_to_vmem [thread:$0]  %s0, 12288, %s15, [#allocation3], 128, 128, 8
    $region5: #{tpu_custom_call.1} parent=1 // pred_fallthru
      _
    // Predicated region
    $region6: #{tpu_custom_call.1} parent=1 // pred_check
      _
    $region7: #{tpu_custom_call.1} parent=1 // pred_check_branch
      %22 = sbr.rel (0) target = $region9
    $region8: #{tpu_custom_call.1} parent=1 // pred_region
      %s24 = ssub.s32 2048, 2048
      %25 = vsyncadd [#allocation5], %s24
      %s26 = sshll.u32 [#allocation4], 4
      %s27 = int_to_ptr.vmem [resolvable:$true] %s26
      %32 = dma.hbm_to_vmem [thread:$0]  %s1, 2048, %s27, [#allocation5], 128, 128, 8
    $region9: #{tpu_custom_call.1} parent=1 // pred_fallthru
      _
    // Predicated region
    $region10: #{tpu_custom_call.1} parent=1 // pred_check
      _
    $region11: #{tpu_custom_call.1} parent=1 // pred_check_branch
      %34 = sbr.rel (0) target = $region13
    $region12: #{tpu_custom_call.1} parent=1 // pred_region
      %35 = dma.done [#allocation3], 12288
    $region13: #{tpu_custom_call.1} parent=1 // pred_fallthru
      _
    // Predicated region
    $region14: #{tpu_custom_call.1} parent=1 // pred_check
      _
    $region15: #{tpu_custom_call.1} parent=1 // pred_check_branch
      %37 = sbr.rel (0) target = $region17
    $region16: #{tpu_custom_call.1} parent=1 // pred_region
      %38 = dma.done [#allocation5], 2048
    $region17: #{tpu_custom_call.1} parent=1 // pred_fallthru
      _
    %v39 = vld [vmem:[#allocation2] sm:$0xff]
    %v40 = vld [vmem:[#allocation2 + $0x8] sm:$0xff]
    %v41 = vld [vmem:[#allocation2 + $0x10] sm:$0xff]
    %v42 = vld [vmem:[#allocation2 + $0x18] sm:$0xff]
    %v43 = vld [vmem:[#allocation2 + $0x20] sm:$0xff]
    %v44 = vld [vmem:[#allocation2 + $0x28] sm:$0xff]
    %v45 = vld [vmem:[#allocation2 + $0x30] sm:$0xff]
    %v46 = vld [vmem:[#allocation2 + $0x38] sm:$0xff]
    %v47 = vld [vmem:[#allocation2 + $0x40] sm:$0xff]
    %v48 = vld [vmem:[#allocation2 + $0x48] sm:$0xff]
    %v49 = vld [vmem:[#allocation2 + $0x50] sm:$0xff]
    %v50 = vld [vmem:[#allocation2 + $0x58] sm:$0xff]
    %v51 = vld [vmem:[#allocation2 + $0x60] sm:$0xff]
    %v52 = vld [vmem:[#allocation2 + $0x68] sm:$0xff]
    %v53 = vld [vmem:[#allocation2 + $0x70] sm:$0xff]
    %v54 = vld [vmem:[#allocation2 + $0x78] sm:$0xff]
    %v55 = vld [vmem:[#allocation2 + $0x80] sm:$0xff]
    %v56 = vld [vmem:[#allocation2 + $0x88] sm:$0xff]
    %v57 = vld [vmem:[#allocation2 + $0x90] sm:$0xff]
    %v58 = vld [vmem:[#allocation2 + $0x98] sm:$0xff]
    %v59 = vld [vmem:[#allocation2 + $0xa0] sm:$0xff]
    %v60 = vld [vmem:[#allocation2 + $0xa8] sm:$0xff]
    %v61 = vld [vmem:[#allocation2 + $0xb0] sm:$0xff]
    %v62 = vld [vmem:[#allocation2 + $0xb8] sm:$0xff]
    %v63 = vld [vmem:[#allocation2 + $0xc0] sm:$0xff]
    %v64 = vld [vmem:[#allocation2 + $0xc8] sm:$0xff]
    %v65 = vld [vmem:[#allocation2 + $0xd0] sm:$0xff]
    %v66 = vld [vmem:[#allocation2 + $0xd8] sm:$0xff]
    %v67 = vld [vmem:[#allocation2 + $0xe0] sm:$0xff]
    %v68 = vld [vmem:[#allocation2 + $0xe8] sm:$0xff]
    %v69 = vld [vmem:[#allocation2 + $0xf0] sm:$0xff]
    %v70 = vld [vmem:[#allocation2 + $0xf8] sm:$0xff]
    %v71 = vld [vmem:[#allocation2 + $0x100] sm:$0xff]
    %v72 = vld [vmem:[#allocation2 + $0x108] sm:$0xff]
    %v73 = vld [vmem:[#allocation2 + $0x110] sm:$0xff]
    %v74 = vld [vmem:[#allocation2 + $0x118] sm:$0xff]
    %v75 = vld [vmem:[#allocation2 + $0x120] sm:$0xff]
    %v76 = vld [vmem:[#allocation2 + $0x128] sm:$0xff]
    %v77 = vld [vmem:[#allocation2 + $0x130] sm:$0xff]
    %v78 = vld [vmem:[#allocation2 + $0x138] sm:$0xff]
    %v79 = vld [vmem:[#allocation2 + $0x140] sm:$0xff]
    %v80 = vld [vmem:[#allocation2 + $0x148] sm:$0xff]
    %v81 = vld [vmem:[#allocation2 + $0x150] sm:$0xff]
    %v82 = vld [vmem:[#allocation2 + $0x158] sm:$0xff]
    %v83 = vld [vmem:[#allocation2 + $0x160] sm:$0xff]
    %v84 = vld [vmem:[#allocation2 + $0x168] sm:$0xff]
    %v85 = vld [vmem:[#allocation2 + $0x170] sm:$0xff]
    %v86 = vld [vmem:[#allocation2 + $0x178] sm:$0xff]
    %v87 = vld [vmem:[#allocation2 + $0x180] sm:$0xff]
    %v88 = vld [vmem:[#allocation2 + $0x188] sm:$0xff]
    %v89 = vld [vmem:[#allocation2 + $0x190] sm:$0xff]
    %v90 = vld [vmem:[#allocation2 + $0x198] sm:$0xff]
    %v91 = vld [vmem:[#allocation2 + $0x1a0] sm:$0xff]
    %v92 = vld [vmem:[#allocation2 + $0x1a8] sm:$0xff]
    %v93 = vld [vmem:[#allocation2 + $0x1b0] sm:$0xff]
    %v94 = vld [vmem:[#allocation2 + $0x1b8] sm:$0xff]
    %v95 = vld [vmem:[#allocation2 + $0x1c0] sm:$0xff]
    %v96 = vld [vmem:[#allocation2 + $0x1c8] sm:$0xff]
    %v97 = vld [vmem:[#allocation2 + $0x1d0] sm:$0xff]
    %v98 = vld [vmem:[#allocation2 + $0x1d8] sm:$0xff]
    %v99 = vld [vmem:[#allocation2 + $0x1e0] sm:$0xff]
    %v100 = vld [vmem:[#allocation2 + $0x1e8] sm:$0xff]
    %v101 = vld [vmem:[#allocation2 + $0x1f0] sm:$0xff]
    %v102 = vld [vmem:[#allocation2 + $0x1f8] sm:$0xff]
    %v103 = vld [vmem:[#allocation2 + $0x200] sm:$0xff]
    %v104 = vld [vmem:[#allocation2 + $0x208] sm:$0xff]
    %v105 = vld [vmem:[#allocation2 + $0x210] sm:$0xff]
    %v106 = vld [vmem:[#allocation2 + $0x218] sm:$0xff]
    %v107 = vld [vmem:[#allocation2 + $0x220] sm:$0xff]
    %v108 = vld [vmem:[#allocation2 + $0x228] sm:$0xff]
    %v109 = vld [vmem:[#allocation2 + $0x230] sm:$0xff]
    %v110 = vld [vmem:[#allocation2 + $0x238] sm:$0xff]
    %v111 = vld [vmem:[#allocation2 + $0x240] sm:$0xff]
    %v112 = vld [vmem:[#allocation2 + $0x248] sm:$0xff]
    %v113 = vld [vmem:[#allocation2 + $0x250] sm:$0xff]
    %v114 = vld [vmem:[#allocation2 + $0x258] sm:$0xff]
    %v115 = vld [vmem:[#allocation2 + $0x260] sm:$0xff]
    %v116 = vld [vmem:[#allocation2 + $0x268] sm:$0xff]
    %v117 = vld [vmem:[#allocation2 + $0x270] sm:$0xff]
    %v118 = vld [vmem:[#allocation2 + $0x278] sm:$0xff]
    %v119 = vld [vmem:[#allocation2 + $0x280] sm:$0xff]
    %v120 = vld [vmem:[#allocation2 + $0x288] sm:$0xff]
    %v121 = vld [vmem:[#allocation2 + $0x290] sm:$0xff]
    %v122 = vld [vmem:[#allocation2 + $0x298] sm:$0xff]
    %v123 = vld [vmem:[#allocation2 + $0x2a0] sm:$0xff]
    %v124 = vld [vmem:[#allocation2 + $0x2a8] sm:$0xff]
    %v125 = vld [vmem:[#allocation2 + $0x2b0] sm:$0xff]
    %v126 = vld [vmem:[#allocation2 + $0x2b8] sm:$0xff]
    %v127 = vld [vmem:[#allocation2 + $0x2c0] sm:$0xff]
    %v128 = vld [vmem:[#allocation2 + $0x2c8] sm:$0xff]
    %v129 = vld [vmem:[#allocation2 + $0x2d0] sm:$0xff]
    %v130 = vld [vmem:[#allocation2 + $0x2d8] sm:$0xff]
    %v131 = vld [vmem:[#allocation2 + $0x2e0] sm:$0xff]
    %v132 = vld [vmem:[#allocation2 + $0x2e8] sm:$0xff]
    %v133 = vld [vmem:[#allocation2 + $0x2f0] sm:$0xff]
    %v134 = vld [vmem:[#allocation2 + $0x2f8] sm:$0xff]
    %v135 = vadd.f32 %v39, %v40
    %v136 = vadd.f32 %v135, %v41
    %v137 = vadd.f32 %v136, %v42
    %v138 = vadd.f32 %v137, %v43
    %v139 = vadd.f32 %v138, %v44
    %v140 = vadd.f32 %v139, %v45
    %v141 = vadd.f32 %v140, %v46
    %v142 = vrot.slane %v141, 4
    %v143 = vadd.f32 %v141, %v142
    %v144 = vrot.slane %v143, 2
    %v145 = vadd.f32 %v143, %v144
    %v146 = vrot.slane %v145, 1
    %v147 = vadd.f32 %v145, %v146
    %v148 = vadd.f32 %v47, %v48
    %v149 = vadd.f32 %v148, %v49
    %v150 = vadd.f32 %v149, %v50
    %v151 = vadd.f32 %v150, %v51
    %v152 = vadd.f32 %v151, %v52
    %v153 = vadd.f32 %v152, %v53
    %v154 = vadd.f32 %v153, %v54
    %v155 = vrot.slane %v154, 4
    %v156 = vadd.f32 %v154, %v155
    %v157 = vrot.slane %v156, 2
    %v158 = vadd.f32 %v156, %v157
    %v159 = vrot.slane %v158, 1
    %v160 = vadd.f32 %v158, %v159
    %v161 = vadd.f32 %v55, %v56
    %v162 = vadd.f32 %v161, %v57
    %v163 = vadd.f32 %v162, %v58
    %v164 = vadd.f32 %v163, %v59
    %v165 = vadd.f32 %v164, %v60
    %v166 = vadd.f32 %v165, %v61
    %v167 = vadd.f32 %v166, %v62
    %v168 = vrot.slane %v167, 4
    %v169 = vadd.f32 %v167, %v168
    %v170 = vrot.slane %v169, 2
    %v171 = vadd.f32 %v169, %v170
    %v172 = vrot.slane %v171, 1
    %v173 = vadd.f32 %v171, %v172
    %v174 = vadd.f32 %v63, %v64
    %v175 = vadd.f32 %v174, %v65
    %v176 = vadd.f32 %v175, %v66
    %v177 = vadd.f32 %v176, %v67
    %v178 = vadd.f32 %v177, %v68
    %v179 = vadd.f32 %v178, %v69
    %v180 = vadd.f32 %v179, %v70
    %v181 = vrot.slane %v180, 4
    %v182 = vadd.f32 %v180, %v181
    %v183 = vrot.slane %v182, 2
    %v184 = vadd.f32 %v182, %v183
    %v185 = vrot.slane %v184, 1
    %v186 = vadd.f32 %v184, %v185
    %v187 = vadd.f32 %v71, %v72
    %v188 = vadd.f32 %v187, %v73
    %v189 = vadd.f32 %v188, %v74
    %v190 = vadd.f32 %v189, %v75
    %v191 = vadd.f32 %v190, %v76
    %v192 = vadd.f32 %v191, %v77
    %v193 = vadd.f32 %v192, %v78
    %v194 = vrot.slane %v193, 4
    %v195 = vadd.f32 %v193, %v194
    %v196 = vrot.slane %v195, 2
    %v197 = vadd.f32 %v195, %v196
    %v198 = vrot.slane %v197, 1
    %v199 = vadd.f32 %v197, %v198
    %v200 = vadd.f32 %v79, %v80
    %v201 = vadd.f32 %v200, %v81
    %v202 = vadd.f32 %v201, %v82
    %v203 = vadd.f32 %v202, %v83
    %v204 = vadd.f32 %v203, %v84
    %v205 = vadd.f32 %v204, %v85
    %v206 = vadd.f32 %v205, %v86
    %v207 = vrot.slane %v206, 4
    %v208 = vadd.f32 %v206, %v207
    %v209 = vrot.slane %v208, 2
    %v210 = vadd.f32 %v208, %v209
    %v211 = vrot.slane %v210, 1
    %v212 = vadd.f32 %v210, %v211
    %v213 = vadd.f32 %v87, %v88
    %v214 = vadd.f32 %v213, %v89
    %v215 = vadd.f32 %v214, %v90
    %v216 = vadd.f32 %v215, %v91
    %v217 = vadd.f32 %v216, %v92
    %v218 = vadd.f32 %v217, %v93
    %v219 = vadd.f32 %v218, %v94
    %v220 = vrot.slane %v219, 4
    %v221 = vadd.f32 %v219, %v220
    %v222 = vrot.slane %v221, 2
    %v223 = vadd.f32 %v221, %v222
    %v224 = vrot.slane %v223, 1
    %v225 = vadd.f32 %v223, %v224
    %v226 = vadd.f32 %v95, %v96
    %v227 = vadd.f32 %v226, %v97
    %v228 = vadd.f32 %v227, %v98
    %v229 = vadd.f32 %v228, %v99
    %v230 = vadd.f32 %v229, %v100
    %v231 = vadd.f32 %v230, %v101
    %v232 = vadd.f32 %v231, %v102
    %v233 = vrot.slane %v232, 4
    %v234 = vadd.f32 %v232, %v233
    %v235 = vrot.slane %v234, 2
    %v236 = vadd.f32 %v234, %v235
    %v237 = vrot.slane %v236, 1
    %v238 = vadd.f32 %v236, %v237
    %v239 = vadd.f32 %v103, %v104
    %v240 = vadd.f32 %v239, %v105
    %v241 = vadd.f32 %v240, %v106
    %v242 = vadd.f32 %v241, %v107
    %v243 = vadd.f32 %v242, %v108
    %v244 = vadd.f32 %v243, %v109
    %v245 = vadd.f32 %v244, %v110
    %v246 = vrot.slane %v245, 4
    %v247 = vadd.f32 %v245, %v246
    %v248 = vrot.slane %v247, 2
    %v249 = vadd.f32 %v247, %v248
    %v250 = vrot.slane %v249, 1
    %v251 = vadd.f32 %v249, %v250
    %v252 = vadd.f32 %v111, %v112
    %v253 = vadd.f32 %v252, %v113
    %v254 = vadd.f32 %v253, %v114
    %v255 = vadd.f32 %v254, %v115
    %v256 = vadd.f32 %v255, %v116
    %v257 = vadd.f32 %v256, %v117
    %v258 = vadd.f32 %v257, %v118
    %v259 = vrot.slane %v258, 4
    %v260 = vadd.f32 %v258, %v259
    %v261 = vrot.slane %v260, 2
    %v262 = vadd.f32 %v260, %v261
    %v263 = vrot.slane %v262, 1
    %v264 = vadd.f32 %v262, %v263
    %v265 = vadd.f32 %v119, %v120
    %v266 = vadd.f32 %v265, %v121
    %v267 = vadd.f32 %v266, %v122
    %v268 = vadd.f32 %v267, %v123
    %v269 = vadd.f32 %v268, %v124
    %v270 = vadd.f32 %v269, %v125
    %v271 = vadd.f32 %v270, %v126
    %v272 = vrot.slane %v271, 4
    %v273 = vadd.f32 %v271, %v272
    %v274 = vrot.slane %v273, 2
    %v275 = vadd.f32 %v273, %v274
    %v276 = vrot.slane %v275, 1
    %v277 = vadd.f32 %v275, %v276
    %v278 = vadd.f32 %v127, %v128
    %v279 = vadd.f32 %v278, %v129
    %v280 = vadd.f32 %v279, %v130
    %v281 = vadd.f32 %v280, %v131
    %v282 = vadd.f32 %v281, %v132
    %v283 = vadd.f32 %v282, %v133
    %v284 = vadd.f32 %v283, %v134
    %v285 = vrot.slane %v284, 4
    %v286 = vadd.f32 %v284, %v285
    %v287 = vrot.slane %v286, 2
    %v288 = vadd.f32 %v286, %v287
    %v289 = vrot.slane %v288, 1
    %v290 = vadd.f32 %v288, %v289
    %v291 = vld [vmem:[#allocation4] sm:$0xff]
    %v292 = vld [vmem:[#allocation4 + $0x8] sm:$0xff]
    %v293 = vld [vmem:[#allocation4 + $0x10] sm:$0xff]
    %v294 = vld [vmem:[#allocation4 + $0x18] sm:$0xff]
    %v295 = vld [vmem:[#allocation4 + $0x20] sm:$0xff]
    %v296 = vld [vmem:[#allocation4 + $0x28] sm:$0xff]
    %v297 = vld [vmem:[#allocation4 + $0x30] sm:$0xff]
    %v298 = vld [vmem:[#allocation4 + $0x38] sm:$0xff]
    %v299 = vld [vmem:[#allocation4 + $0x40] sm:$0xff]
    %v300 = vld [vmem:[#allocation4 + $0x48] sm:$0xff]
    %v301 = vld [vmem:[#allocation4 + $0x50] sm:$0xff]
    %v302 = vld [vmem:[#allocation4 + $0x58] sm:$0xff]
    %v303 = vld [vmem:[#allocation4 + $0x60] sm:$0xff]
    %v304 = vld [vmem:[#allocation4 + $0x68] sm:$0xff]
    %v305 = vld [vmem:[#allocation4 + $0x70] sm:$0xff]
    %v306 = vld [vmem:[#allocation4 + $0x78] sm:$0xff]
    %vm319 = vcmask 1041409
    %v320 = vsel %vm319, %v160, %v147
    %vm321 = vcmask 1042434
    %v322 = vsel %vm321, %v173, %v320
    %vm323 = vcmask 1043459
    %v324 = vsel %vm323, %v186, %v322
    %vm325 = vcmask 1044484
    %v326 = vsel %vm325, %v199, %v324
    %vm327 = vcmask 1045509
    %v328 = vsel %vm327, %v212, %v326
    %vm329 = vcmask 1046534
    %v330 = vsel %vm329, %v225, %v328
    %vm331 = vcmask 1047559
    %v332 = vsel %vm331, %v238, %v330
    %v333 = vsel %vm319, %v264, %v251
    %v334 = vsel %vm321, %v277, %v333
    %v335 = vsel %vm323, %v290, %v334
    %338 = vmatprep.subr.mxu0 0.0
    %v339 = vand.u32 %v291, 4294901760
    %340 = vmatpush1.msra.mxu0 %v339
    %341 = vmatprep.subr.mxu0 0.0
    %v342 = vand.u32 %v292, 4294901760
    %343 = vmatpush1.msra.mxu0 %v342
    %344 = vmatprep.subr.mxu0 0.0
    %v345 = vand.u32 %v293, 4294901760
    %346 = vmatpush1.msra.mxu0 %v345
    %347 = vmatprep.subr.mxu0 0.0
    %v348 = vand.u32 %v294, 4294901760
    %349 = vmatpush1.msra.mxu0 %v348
    %350 = vmatprep.subr.mxu0 0.0
    %v351 = vand.u32 %v295, 4294901760
    %352 = vmatpush1.msra.mxu0 %v351
    %353 = vmatprep.subr.mxu0 0.0
    %v354 = vand.u32 %v296, 4294901760
    %355 = vmatpush1.msra.mxu0 %v354
    %356 = vmatprep.subr.mxu0 0.0
    %v357 = vand.u32 %v297, 4294901760
    %358 = vmatpush1.msra.mxu0 %v357
    %359 = vmatprep.subr.mxu0 0.0
    %v360 = vand.u32 %v298, 4294901760
    %361 = vmatpush1.msra.mxu0 %v360
    %362 = vmatprep.subr.mxu0 0.0
    %v363 = vand.u32 %v299, 4294901760
    %364 = vmatpush1.msra.mxu0 %v363
    %365 = vmatprep.subr.mxu0 0.0
    %v366 = vand.u32 %v300, 4294901760
    %367 = vmatpush1.msra.mxu0 %v366
    %368 = vmatprep.subr.mxu0 0.0
    %v369 = vand.u32 %v301, 4294901760
    %370 = vmatpush1.msra.mxu0 %v369
    %371 = vmatprep.subr.mxu0 0.0
    %v372 = vand.u32 %v302, 4294901760
    %373 = vmatpush1.msra.mxu0 %v372
    %374 = vmatprep.subr.mxu0 0.0
    %v375 = vand.u32 %v303, 4294901760
    %376 = vmatpush1.msra.mxu0 %v375
    %377 = vmatprep.subr.mxu0 0.0
    %v378 = vand.u32 %v304, 4294901760
    %379 = vmatpush1.msra.mxu0 %v378
    %380 = vmatprep.subr.mxu0 0.0
    %v381 = vand.u32 %v305, 4294901760
    %382 = vmatpush1.msra.mxu0 %v381
    %383 = vmatprep.subr.mxu0 0.0
    %v384 = vand.u32 %v306, 4294901760
    %385 = vmatpush1.msra.mxu0 %v384
    %386 = vmatprep.subr.mxu0 0.0
    %387 = vmatpush1.msra.mxu0 0.0
    %388 = vmatprep.subr.mxu0 0.0
    %389 = vmatpush1.msra.mxu0 0.0
    %390 = vmatprep.subr.mxu0 0.0
    %391 = vmatpush1.msra.mxu0 0.0
    %392 = vmatprep.subr.mxu0 0.0
    %393 = vmatpush1.msra.mxu0 0.0
    %394 = vmatprep.subr.mxu0 0.0
    %395 = vmatpush1.msra.mxu0 0.0
    %396 = vmatprep.subr.mxu0 0.0
    %397 = vmatpush1.msra.mxu0 0.0
    %398 = vmatprep.subr.mxu0 0.0
    %399 = vmatpush1.msra.mxu0 0.0
    %400 = vmatprep.subr.mxu0 0.0
    %401 = vmatpush1.msra.mxu0 0.0
    %402 = vmatprep.subr.mxu0 0.0
    %403 = vmatpush1.msra.mxu0 0.0
    %404 = vmatprep.subr.mxu0 0.0
    %405 = vmatpush1.msra.mxu0 0.0
    %406 = vmatprep.subr.mxu0 0.0
    %407 = vmatpush1.msra.mxu0 0.0
    %408 = vmatprep.subr.mxu0 0.0
    %409 = vmatpush1.msra.mxu0 0.0
    %410 = vmatprep.subr.mxu0 0.0
    %411 = vmatpush1.msra.mxu0 0.0
    %412 = vmatprep.subr.mxu0 0.0
    %413 = vmatpush1.msra.mxu0 0.0
    %414 = vmatprep.subr.mxu0 0.0
    %415 = vmatpush1.msra.mxu0 0.0
    %416 = vmatprep.subr.mxu0 0.0
    %417 = vmatpush1.msra.mxu0 0.0
    %418 = vmatprep.mubr.f32.mxu0 0.0
    %v419 = vand.u32 %v332, 4294901760
    %v420 = vsub.f32 %v332, %v419
    %v421 = vand.u32 %v420, 4294901760
    %v422 = vsub.f32 %v420, %v421
    %v423 = vand.u32 %v422, 4294901760
    %424 = vmatmul.mubr.f32.gmra.mrb[0].mxu0 %v423
    %v425 = vpop.f32.mrb[0].mxu0
    %v426 = vadd.f32 0.0, %v425
    %v427 = vpop.f32.mrb[0].mxu0
    %428 = vmatprep.mubr.f32.mxu0 0.0
    %v429 = vand.u32 %v335, 4294901760
    %v430 = vsub.f32 %v335, %v429
    %v431 = vand.u32 %v430, 4294901760
    %v432 = vsub.f32 %v430, %v431
    %v433 = vand.u32 %v432, 4294901760
    %434 = vmatmul.mubr.f32.gmra.mrb[0].mxu0 %v433
    %v435 = vpop.f32.mrb[0].mxu0
    %v436 = vadd.f32 0.0, %v435
    %v437 = vpop.f32.mrb[0].mxu0
    %438 = vdwg.mxu0
    %439 = vmatprep.subr.mxu0 0.0
    %v440 = vand.u32 %v291, 4294901760
    %v441 = vsub.f32 %v291, %v440
    %v442 = vand.u32 %v441, 4294901760
    %v443 = vsub.f32 %v441, %v442
    %v444 = vand.u32 %v443, 4294901760
    %445 = vmatpush1.msra.mxu0 %v444
    %446 = vmatprep.subr.mxu0 0.0
    %v447 = vand.u32 %v292, 4294901760
    %v448 = vsub.f32 %v292, %v447
    %v449 = vand.u32 %v448, 4294901760
    %v450 = vsub.f32 %v448, %v449
    %v451 = vand.u32 %v450, 4294901760
    %452 = vmatpush1.msra.mxu0 %v451
    %453 = vmatprep.subr.mxu0 0.0
    %v454 = vand.u32 %v293, 4294901760
    %v455 = vsub.f32 %v293, %v454
    %v456 = vand.u32 %v455, 4294901760
    %v457 = vsub.f32 %v455, %v456
    %v458 = vand.u32 %v457, 4294901760
    %459 = vmatpush1.msra.mxu0 %v458
    %460 = vmatprep.subr.mxu0 0.0
    %v461 = vand.u32 %v294, 4294901760
    %v462 = vsub.f32 %v294, %v461
    %v463 = vand.u32 %v462, 4294901760
    %v464 = vsub.f32 %v462, %v463
    %v465 = vand.u32 %v464, 4294901760
    %466 = vmatpush1.msra.mxu0 %v465
    %467 = vmatprep.subr.mxu0 0.0
    %v468 = vand.u32 %v295, 4294901760
    %v469 = vsub.f32 %v295, %v468
    %v470 = vand.u32 %v469, 4294901760
    %v471 = vsub.f32 %v469, %v470
    %v472 = vand.u32 %v471, 4294901760
    %473 = vmatpush1.msra.mxu0 %v472
    %474 = vmatprep.subr.mxu0 0.0
    %v475 = vand.u32 %v296, 4294901760
    %v476 = vsub.f32 %v296, %v475
    %v477 = vand.u32 %v476, 4294901760
    %v478 = vsub.f32 %v476, %v477
    %v479 = vand.u32 %v478, 4294901760
    %480 = vmatpush1.msra.mxu0 %v479
    %481 = vmatprep.subr.mxu0 0.0
    %v482 = vand.u32 %v297, 4294901760
    %v483 = vsub.f32 %v297, %v482
    %v484 = vand.u32 %v483, 4294901760
    %v485 = vsub.f32 %v483, %v484
    %v486 = vand.u32 %v485, 4294901760
    %487 = vmatpush1.msra.mxu0 %v486
    %488 = vmatprep.subr.mxu0 0.0
    %v489 = vand.u32 %v298, 4294901760
    %v490 = vsub.f32 %v298, %v489
    %v491 = vand.u32 %v490, 4294901760
    %v492 = vsub.f32 %v490, %v491
    %v493 = vand.u32 %v492, 4294901760
    %494 = vmatpush1.msra.mxu0 %v493
    %495 = vmatprep.subr.mxu0 0.0
    %v496 = vand.u32 %v299, 4294901760
    %v497 = vsub.f32 %v299, %v496
    %v498 = vand.u32 %v497, 4294901760
    %v499 = vsub.f32 %v497, %v498
    %v500 = vand.u32 %v499, 4294901760
    %501 = vmatpush1.msra.mxu0 %v500
    %502 = vmatprep.subr.mxu0 0.0
    %v503 = vand.u32 %v300, 4294901760
    %v504 = vsub.f32 %v300, %v503
    %v505 = vand.u32 %v504, 4294901760
    %v506 = vsub.f32 %v504, %v505
    %v507 = vand.u32 %v506, 4294901760
    %508 = vmatpush1.msra.mxu0 %v507
    %509 = vmatprep.subr.mxu0 0.0
    %v510 = vand.u32 %v301, 4294901760
    %v511 = vsub.f32 %v301, %v510
    %v512 = vand.u32 %v511, 4294901760
    %v513 = vsub.f32 %v511, %v512
    %v514 = vand.u32 %v513, 4294901760
    %515 = vmatpush1.msra.mxu0 %v514
    %516 = vmatprep.subr.mxu0 0.0
    %v517 = vand.u32 %v302, 4294901760
    %v518 = vsub.f32 %v302, %v517
    %v519 = vand.u32 %v518, 4294901760
    %v520 = vsub.f32 %v518, %v519
    %v521 = vand.u32 %v520, 4294901760
    %522 = vmatpush1.msra.mxu0 %v521
    %523 = vmatprep.subr.mxu0 0.0
    %v524 = vand.u32 %v303, 4294901760
    %v525 = vsub.f32 %v303, %v524
    %v526 = vand.u32 %v525, 4294901760
    %v527 = vsub.f32 %v525, %v526
    %v528 = vand.u32 %v527, 4294901760
    %529 = vmatpush1.msra.mxu0 %v528
    %530 = vmatprep.subr.mxu0 0.0
    %v531 = vand.u32 %v304, 4294901760
    %v532 = vsub.f32 %v304, %v531
    %v533 = vand.u32 %v532, 4294901760
    %v534 = vsub.f32 %v532, %v533
    %v535 = vand.u32 %v534, 4294901760
    %536 = vmatpush1.msra.mxu0 %v535
    %537 = vmatprep.subr.mxu0 0.0
    %v538 = vand.u32 %v305, 4294901760
    %v539 = vsub.f32 %v305, %v538
    %v540 = vand.u32 %v539, 4294901760
    %v541 = vsub.f32 %v539, %v540
    %v542 = vand.u32 %v541, 4294901760
    %543 = vmatpush1.msra.mxu0 %v542
    %544 = vmatprep.subr.mxu0 0.0
    %v545 = vand.u32 %v306, 4294901760
    %v546 = vsub.f32 %v306, %v545
    %v547 = vand.u32 %v546, 4294901760
    %v548 = vsub.f32 %v546, %v547
    %v549 = vand.u32 %v548, 4294901760
    %550 = vmatpush1.msra.mxu0 %v549
    %551 = vmatprep.subr.mxu0 0.0
    %552 = vmatpush1.msra.mxu0 0.0
    %553 = vmatprep.subr.mxu0 0.0
    %554 = vmatpush1.msra.mxu0 0.0
    %555 = vmatprep.subr.mxu0 0.0
    %556 = vmatpush1.msra.mxu0 0.0
    %557 = vmatprep.subr.mxu0 0.0
    %558 = vmatpush1.msra.mxu0 0.0
    %559 = vmatprep.subr.mxu0 0.0
    %560 = vmatpush1.msra.mxu0 0.0
    %561 = vmatprep.subr.mxu0 0.0
    %562 = vmatpush1.msra.mxu0 0.0
    %563 = vmatprep.subr.mxu0 0.0
    %564 = vmatpush1.msra.mxu0 0.0
    %565 = vmatprep.subr.mxu0 0.0
    %566 = vmatpush1.msra.mxu0 0.0
    %567 = vmatprep.subr.mxu0 0.0
    %568 = vmatpush1.msra.mxu0 0.0
    %569 = vmatprep.subr.mxu0 0.0
    %570 = vmatpush1.msra.mxu0 0.0
    %571 = vmatprep.subr.mxu0 0.0
    %572 = vmatpush1.msra.mxu0 0.0
    %573 = vmatprep.subr.mxu0 0.0
    %574 = vmatpush1.msra.mxu0 0.0
    %575 = vmatprep.subr.mxu0 0.0
    %576 = vmatpush1.msra.mxu0 0.0
    %577 = vmatprep.subr.mxu0 0.0
    %578 = vmatpush1.msra.mxu0 0.0
    %579 = vmatprep.subr.mxu0 0.0
    %580 = vmatpush1.msra.mxu0 0.0
    %581 = vmatprep.subr.mxu0 0.0
    %582 = vmatpush1.msra.mxu0 0.0
    %583 = vmatprep.mubr.f32.mxu0 0.0
    %v584 = vand.u32 %v332, 4294901760
    %585 = vmatmul.mubr.f32.gmra.mrb[0].mxu0 %v584
    %v586 = vpop.f32.mrb[0].mxu0
    %v587 = vadd.f32 %v426, %v586
    %v588 = vpop.f32.mrb[0].mxu0
    %589 = vmatprep.mubr.f32.mxu0 0.0
    %v590 = vand.u32 %v335, 4294901760
    %591 = vmatmul.mubr.f32.gmra.mrb[0].mxu0 %v590
    %v592 = vpop.f32.mrb[0].mxu0
    %v593 = vadd.f32 %v436, %v592
    %v594 = vpop.f32.mrb[0].mxu0
    %595 = vdwg.mxu0
    %596 = vmatprep.subr.mxu0 0.0
    %v597 = vand.u32 %v291, 4294901760
    %v598 = vsub.f32 %v291, %v597
    %599 = vmatpush1.msra.mxu0 %v598
    %600 = vmatprep.subr.mxu0 0.0
    %v601 = vand.u32 %v292, 4294901760
    %v602 = vsub.f32 %v292, %v601
    %603 = vmatpush1.msra.mxu0 %v602
    %604 = vmatprep.subr.mxu0 0.0
    %v605 = vand.u32 %v293, 4294901760
    %v606 = vsub.f32 %v293, %v605
    %607 = vmatpush1.msra.mxu0 %v606
    %608 = vmatprep.subr.mxu0 0.0
    %v609 = vand.u32 %v294, 4294901760
    %v610 = vsub.f32 %v294, %v609
    %611 = vmatpush1.msra.mxu0 %v610
    %612 = vmatprep.subr.mxu0 0.0
    %v613 = vand.u32 %v295, 4294901760
    %v614 = vsub.f32 %v295, %v613
    %615 = vmatpush1.msra.mxu0 %v614
    %616 = vmatprep.subr.mxu0 0.0
    %v617 = vand.u32 %v296, 4294901760
    %v618 = vsub.f32 %v296, %v617
    %619 = vmatpush1.msra.mxu0 %v618
    %620 = vmatprep.subr.mxu0 0.0
    %v621 = vand.u32 %v297, 4294901760
    %v622 = vsub.f32 %v297, %v621
    %623 = vmatpush1.msra.mxu0 %v622
    %624 = vmatprep.subr.mxu0 0.0
    %v625 = vand.u32 %v298, 4294901760
    %v626 = vsub.f32 %v298, %v625
    %627 = vmatpush1.msra.mxu0 %v626
    %628 = vmatprep.subr.mxu0 0.0
    %v629 = vand.u32 %v299, 4294901760
    %v630 = vsub.f32 %v299, %v629
    %631 = vmatpush1.msra.mxu0 %v630
    %632 = vmatprep.subr.mxu0 0.0
    %v633 = vand.u32 %v300, 4294901760
    %v634 = vsub.f32 %v300, %v633
    %635 = vmatpush1.msra.mxu0 %v634
    %636 = vmatprep.subr.mxu0 0.0
    %v637 = vand.u32 %v301, 4294901760
    %v638 = vsub.f32 %v301, %v637
    %639 = vmatpush1.msra.mxu0 %v638
    %640 = vmatprep.subr.mxu0 0.0
    %v641 = vand.u32 %v302, 4294901760
    %v642 = vsub.f32 %v302, %v641
    %643 = vmatpush1.msra.mxu0 %v642
    %644 = vmatprep.subr.mxu0 0.0
    %v645 = vand.u32 %v303, 4294901760
    %v646 = vsub.f32 %v303, %v645
    %647 = vmatpush1.msra.mxu0 %v646
    %648 = vmatprep.subr.mxu0 0.0
    %v649 = vand.u32 %v304, 4294901760
    %v650 = vsub.f32 %v304, %v649
    %651 = vmatpush1.msra.mxu0 %v650
    %652 = vmatprep.subr.mxu0 0.0
    %v653 = vand.u32 %v305, 4294901760
    %v654 = vsub.f32 %v305, %v653
    %655 = vmatpush1.msra.mxu0 %v654
    %656 = vmatprep.subr.mxu0 0.0
    %v657 = vand.u32 %v306, 4294901760
    %v658 = vsub.f32 %v306, %v657
    %659 = vmatpush1.msra.mxu0 %v658
    %660 = vmatprep.subr.mxu0 0.0
    %661 = vmatpush1.msra.mxu0 0.0
    %662 = vmatprep.subr.mxu0 0.0
    %663 = vmatpush1.msra.mxu0 0.0
    %664 = vmatprep.subr.mxu0 0.0
    %665 = vmatpush1.msra.mxu0 0.0
    %666 = vmatprep.subr.mxu0 0.0
    %667 = vmatpush1.msra.mxu0 0.0
    %668 = vmatprep.subr.mxu0 0.0
    %669 = vmatpush1.msra.mxu0 0.0
    %670 = vmatprep.subr.mxu0 0.0
    %671 = vmatpush1.msra.mxu0 0.0
    %672 = vmatprep.subr.mxu0 0.0
    %673 = vmatpush1.msra.mxu0 0.0
    %674 = vmatprep.subr.mxu0 0.0
    %675 = vmatpush1.msra.mxu0 0.0
    %676 = vmatprep.subr.mxu0 0.0
    %677 = vmatpush1.msra.mxu0 0.0
    %678 = vmatprep.subr.mxu0 0.0
    %679 = vmatpush1.msra.mxu0 0.0
    %680 = vmatprep.subr.mxu0 0.0
    %681 = vmatpush1.msra.mxu0 0.0
    %682 = vmatprep.subr.mxu0 0.0
    %683 = vmatpush1.msra.mxu0 0.0
    %684 = vmatprep.subr.mxu0 0.0
    %685 = vmatpush1.msra.mxu0 0.0
    %686 = vmatprep.subr.mxu0 0.0
    %687 = vmatpush1.msra.mxu0 0.0
    %688 = vmatprep.subr.mxu0 0.0
    %689 = vmatpush1.msra.mxu0 0.0
    %690 = vmatprep.subr.mxu0 0.0
    %691 = vmatpush1.msra.mxu0 0.0
    %692 = vmatprep.mubr.f32.mxu0 0.0
    %v693 = vand.u32 %v332, 4294901760
    %v694 = vsub.f32 %v332, %v693
    %695 = vmatmul.mubr.f32.gmra.mrb[0].mxu0 %v694
    %v696 = vpop.f32.mrb[0].mxu0
    %v697 = vadd.f32 %v587, %v696
    %v698 = vpop.f32.mrb[0].mxu0
    %699 = vmatprep.mubr.f32.mxu0 0.0
    %v700 = vand.u32 %v335, 4294901760
    %v701 = vsub.f32 %v335, %v700
    %702 = vmatmul.mubr.f32.gmra.mrb[0].mxu0 %v701
    %v703 = vpop.f32.mrb[0].mxu0
    %v704 = vadd.f32 %v593, %v703
    %v705 = vpop.f32.mrb[0].mxu0
    %706 = vdwg.mxu0
    %707 = vmatprep.subr.mxu0 0.0
    %v708 = vand.u32 %v291, 4294901760
    %709 = vmatpush1.msra.mxu0 %v708
    %710 = vmatprep.subr.mxu0 0.0
    %v711 = vand.u32 %v292, 4294901760
    %712 = vmatpush1.msra.mxu0 %v711
    %713 = vmatprep.subr.mxu0 0.0
    %v714 = vand.u32 %v293, 4294901760
    %715 = vmatpush1.msra.mxu0 %v714
    %716 = vmatprep.subr.mxu0 0.0
    %v717 = vand.u32 %v294, 4294901760
    %718 = vmatpush1.msra.mxu0 %v717
    %719 = vmatprep.subr.mxu0 0.0
    %v720 = vand.u32 %v295, 4294901760
    %721 = vmatpush1.msra.mxu0 %v720
    %722 = vmatprep.subr.mxu0 0.0
    %v723 = vand.u32 %v296, 4294901760
    %724 = vmatpush1.msra.mxu0 %v723
    %725 = vmatprep.subr.mxu0 0.0
    %v726 = vand.u32 %v297, 4294901760
    %727 = vmatpush1.msra.mxu0 %v726
    %728 = vmatprep.subr.mxu0 0.0
    %v729 = vand.u32 %v298, 4294901760
    %730 = vmatpush1.msra.mxu0 %v729
    %731 = vmatprep.subr.mxu0 0.0
    %v732 = vand.u32 %v299, 4294901760
    %733 = vmatpush1.msra.mxu0 %v732
    %734 = vmatprep.subr.mxu0 0.0
    %v735 = vand.u32 %v300, 4294901760
    %736 = vmatpush1.msra.mxu0 %v735
    %737 = vmatprep.subr.mxu0 0.0
    %v738 = vand.u32 %v301, 4294901760
    %739 = vmatpush1.msra.mxu0 %v738
    %740 = vmatprep.subr.mxu0 0.0
    %v741 = vand.u32 %v302, 4294901760
    %742 = vmatpush1.msra.mxu0 %v741
    %743 = vmatprep.subr.mxu0 0.0
    %v744 = vand.u32 %v303, 4294901760
    %745 = vmatpush1.msra.mxu0 %v744
    %746 = vmatprep.subr.mxu0 0.0
    %v747 = vand.u32 %v304, 4294901760
    %748 = vmatpush1.msra.mxu0 %v747
    %749 = vmatprep.subr.mxu0 0.0
    %v750 = vand.u32 %v305, 4294901760
    %751 = vmatpush1.msra.mxu0 %v750
    %752 = vmatprep.subr.mxu0 0.0
    %v753 = vand.u32 %v306, 4294901760
    %754 = vmatpush1.msra.mxu0 %v753
    %755 = vmatprep.subr.mxu0 0.0
    %756 = vmatpush1.msra.mxu0 0.0
    %757 = vmatprep.subr.mxu0 0.0
    %758 = vmatpush1.msra.mxu0 0.0
    %759 = vmatprep.subr.mxu0 0.0
    %760 = vmatpush1.msra.mxu0 0.0
    %761 = vmatprep.subr.mxu0 0.0
    %762 = vmatpush1.msra.mxu0 0.0
    %763 = vmatprep.subr.mxu0 0.0
    %764 = vmatpush1.msra.mxu0 0.0
    %765 = vmatprep.subr.mxu0 0.0
    %766 = vmatpush1.msra.mxu0 0.0
    %767 = vmatprep.subr.mxu0 0.0
    %768 = vmatpush1.msra.mxu0 0.0
    %769 = vmatprep.subr.mxu0 0.0
    %770 = vmatpush1.msra.mxu0 0.0
    %771 = vmatprep.subr.mxu0 0.0
    %772 = vmatpush1.msra.mxu0 0.0
    %773 = vmatprep.subr.mxu0 0.0
    %774 = vmatpush1.msra.mxu0 0.0
    %775 = vmatprep.subr.mxu0 0.0
    %776 = vmatpush1.msra.mxu0 0.0
    %777 = vmatprep.subr.mxu0 0.0
    %778 = vmatpush1.msra.mxu0 0.0
    %779 = vmatprep.subr.mxu0 0.0
    %780 = vmatpush1.msra.mxu0 0.0
    %781 = vmatprep.subr.mxu0 0.0
    %782 = vmatpush1.msra.mxu0 0.0
    %783 = vmatprep.subr.mxu0 0.0
    %784 = vmatpush1.msra.mxu0 0.0
    %785 = vmatprep.subr.mxu0 0.0
    %786 = vmatpush1.msra.mxu0 0.0
    %787 = vmatprep.mubr.f32.mxu0 0.0
    %v788 = vand.u32 %v332, 4294901760
    %v789 = vsub.f32 %v332, %v788
    %v790 = vand.u32 %v789, 4294901760
    %791 = vmatmul.mubr.f32.gmra.mrb[0].mxu0 %v790
    %v792 = vpop.f32.mrb[0].mxu0
    %v793 = vadd.f32 %v697, %v792
    %v794 = vpop.f32.mrb[0].mxu0
    %795 = vmatprep.mubr.f32.mxu0 0.0
    %v796 = vand.u32 %v335, 4294901760
    %v797 = vsub.f32 %v335, %v796
    %v798 = vand.u32 %v797, 4294901760
    %799 = vmatmul.mubr.f32.gmra.mrb[0].mxu0 %v798
    %v800 = vpop.f32.mrb[0].mxu0
    %v801 = vadd.f32 %v704, %v800
    %v802 = vpop.f32.mrb[0].mxu0
    %803 = vdwg.mxu0
    %804 = vmatprep.subr.mxu0 0.0
    %v805 = vand.u32 %v291, 4294901760
    %v806 = vsub.f32 %v291, %v805
    %v807 = vand.u32 %v806, 4294901760
    %808 = vmatpush1.msra.mxu0 %v807
    %809 = vmatprep.subr.mxu0 0.0
    %v810 = vand.u32 %v292, 4294901760
    %v811 = vsub.f32 %v292, %v810
    %v812 = vand.u32 %v811, 4294901760
    %813 = vmatpush1.msra.mxu0 %v812
    %814 = vmatprep.subr.mxu0 0.0
    %v815 = vand.u32 %v293, 4294901760
    %v816 = vsub.f32 %v293, %v815
    %v817 = vand.u32 %v816, 4294901760
    %818 = vmatpush1.msra.mxu0 %v817
    %819 = vmatprep.subr.mxu0 0.0
    %v820 = vand.u32 %v294, 4294901760
    %v821 = vsub.f32 %v294, %v820
    %v822 = vand.u32 %v821, 4294901760
    %823 = vmatpush1.msra.mxu0 %v822
    %824 = vmatprep.subr.mxu0 0.0
    %v825 = vand.u32 %v295, 4294901760
    %v826 = vsub.f32 %v295, %v825
    %v827 = vand.u32 %v826, 4294901760
    %828 = vmatpush1.msra.mxu0 %v827
    %829 = vmatprep.subr.mxu0 0.0
    %v830 = vand.u32 %v296, 4294901760
    %v831 = vsub.f32 %v296, %v830
    %v832 = vand.u32 %v831, 4294901760
    %833 = vmatpush1.msra.mxu0 %v832
    %834 = vmatprep.subr.mxu0 0.0
    %v835 = vand.u32 %v297, 4294901760
    %v836 = vsub.f32 %v297, %v835
    %v837 = vand.u32 %v836, 4294901760
    %838 = vmatpush1.msra.mxu0 %v837
    %839 = vmatprep.subr.mxu0 0.0
    %v840 = vand.u32 %v298, 4294901760
    %v841 = vsub.f32 %v298, %v840
    %v842 = vand.u32 %v841, 4294901760
    %843 = vmatpush1.msra.mxu0 %v842
    %844 = vmatprep.subr.mxu0 0.0
    %v845 = vand.u32 %v299, 4294901760
    %v846 = vsub.f32 %v299, %v845
    %v847 = vand.u32 %v846, 4294901760
    %848 = vmatpush1.msra.mxu0 %v847
    %849 = vmatprep.subr.mxu0 0.0
    %v850 = vand.u32 %v300, 4294901760
    %v851 = vsub.f32 %v300, %v850
    %v852 = vand.u32 %v851, 4294901760
    %853 = vmatpush1.msra.mxu0 %v852
    %854 = vmatprep.subr.mxu0 0.0
    %v855 = vand.u32 %v301, 4294901760
    %v856 = vsub.f32 %v301, %v855
    %v857 = vand.u32 %v856, 4294901760
    %858 = vmatpush1.msra.mxu0 %v857
    %859 = vmatprep.subr.mxu0 0.0
    %v860 = vand.u32 %v302, 4294901760
    %v861 = vsub.f32 %v302, %v860
    %v862 = vand.u32 %v861, 4294901760
    %863 = vmatpush1.msra.mxu0 %v862
    %864 = vmatprep.subr.mxu0 0.0
    %v865 = vand.u32 %v303, 4294901760
    %v866 = vsub.f32 %v303, %v865
    %v867 = vand.u32 %v866, 4294901760
    %868 = vmatpush1.msra.mxu0 %v867
    %869 = vmatprep.subr.mxu0 0.0
    %v870 = vand.u32 %v304, 4294901760
    %v871 = vsub.f32 %v304, %v870
    %v872 = vand.u32 %v871, 4294901760
    %873 = vmatpush1.msra.mxu0 %v872
    %874 = vmatprep.subr.mxu0 0.0
    %v875 = vand.u32 %v305, 4294901760
    %v876 = vsub.f32 %v305, %v875
    %v877 = vand.u32 %v876, 4294901760
    %878 = vmatpush1.msra.mxu0 %v877
    %879 = vmatprep.subr.mxu0 0.0
    %v880 = vand.u32 %v306, 4294901760
    %v881 = vsub.f32 %v306, %v880
    %v882 = vand.u32 %v881, 4294901760
    %883 = vmatpush1.msra.mxu0 %v882
    %884 = vmatprep.subr.mxu0 0.0
    %885 = vmatpush1.msra.mxu0 0.0
    %886 = vmatprep.subr.mxu0 0.0
    %887 = vmatpush1.msra.mxu0 0.0
    %888 = vmatprep.subr.mxu0 0.0
    %889 = vmatpush1.msra.mxu0 0.0
    %890 = vmatprep.subr.mxu0 0.0
    %891 = vmatpush1.msra.mxu0 0.0
    %892 = vmatprep.subr.mxu0 0.0
    %893 = vmatpush1.msra.mxu0 0.0
    %894 = vmatprep.subr.mxu0 0.0
    %895 = vmatpush1.msra.mxu0 0.0
    %896 = vmatprep.subr.mxu0 0.0
    %897 = vmatpush1.msra.mxu0 0.0
    %898 = vmatprep.subr.mxu0 0.0
    %899 = vmatpush1.msra.mxu0 0.0
    %900 = vmatprep.subr.mxu0 0.0
    %901 = vmatpush1.msra.mxu0 0.0
    %902 = vmatprep.subr.mxu0 0.0
    %903 = vmatpush1.msra.mxu0 0.0
    %904 = vmatprep.subr.mxu0 0.0
    %905 = vmatpush1.msra.mxu0 0.0
    %906 = vmatprep.subr.mxu0 0.0
    %907 = vmatpush1.msra.mxu0 0.0
    %908 = vmatprep.subr.mxu0 0.0
    %909 = vmatpush1.msra.mxu0 0.0
    %910 = vmatprep.subr.mxu0 0.0
    %911 = vmatpush1.msra.mxu0 0.0
    %912 = vmatprep.subr.mxu0 0.0
    %913 = vmatpush1.msra.mxu0 0.0
    %914 = vmatprep.subr.mxu0 0.0
    %915 = vmatpush1.msra.mxu0 0.0
    %916 = vmatprep.mubr.f32.mxu0 0.0
    %v917 = vand.u32 %v332, 4294901760
    %918 = vmatmul.mubr.f32.gmra.mrb[0].mxu0 %v917
    %v919 = vpop.f32.mrb[0].mxu0
    %v920 = vadd.f32 %v793, %v919
    %v921 = vpop.f32.mrb[0].mxu0
    %922 = vmatprep.mubr.f32.mxu0 0.0
    %v923 = vand.u32 %v335, 4294901760
    %924 = vmatmul.mubr.f32.gmra.mrb[0].mxu0 %v923
    %v925 = vpop.f32.mrb[0].mxu0
    %v926 = vadd.f32 %v801, %v925
    %v927 = vpop.f32.mrb[0].mxu0
    %928 = vdwg.mxu0
    %929 = vmatprep.subr.mxu0 0.0
    %v930 = vand.u32 %v291, 4294901760
    %931 = vmatpush1.msra.mxu0 %v930
    %932 = vmatprep.subr.mxu0 0.0
    %v933 = vand.u32 %v292, 4294901760
    %934 = vmatpush1.msra.mxu0 %v933
    %935 = vmatprep.subr.mxu0 0.0
    %v936 = vand.u32 %v293, 4294901760
    %937 = vmatpush1.msra.mxu0 %v936
    %938 = vmatprep.subr.mxu0 0.0
    %v939 = vand.u32 %v294, 4294901760
    %940 = vmatpush1.msra.mxu0 %v939
    %941 = vmatprep.subr.mxu0 0.0
    %v942 = vand.u32 %v295, 4294901760
    %943 = vmatpush1.msra.mxu0 %v942
    %944 = vmatprep.subr.mxu0 0.0
    %v945 = vand.u32 %v296, 4294901760
    %946 = vmatpush1.msra.mxu0 %v945
    %947 = vmatprep.subr.mxu0 0.0
    %v948 = vand.u32 %v297, 4294901760
    %949 = vmatpush1.msra.mxu0 %v948
    %950 = vmatprep.subr.mxu0 0.0
    %v951 = vand.u32 %v298, 4294901760
    %952 = vmatpush1.msra.mxu0 %v951
    %953 = vmatprep.subr.mxu0 0.0
    %v954 = vand.u32 %v299, 4294901760
    %955 = vmatpush1.msra.mxu0 %v954
    %956 = vmatprep.subr.mxu0 0.0
    %v957 = vand.u32 %v300, 4294901760
    %958 = vmatpush1.msra.mxu0 %v957
    %959 = vmatprep.subr.mxu0 0.0
    %v960 = vand.u32 %v301, 4294901760
    %961 = vmatpush1.msra.mxu0 %v960
    %962 = vmatprep.subr.mxu0 0.0
    %v963 = vand.u32 %v302, 4294901760
    %964 = vmatpush1.msra.mxu0 %v963
    %965 = vmatprep.subr.mxu0 0.0
    %v966 = vand.u32 %v303, 4294901760
    %967 = vmatpush1.msra.mxu0 %v966
    %968 = vmatprep.subr.mxu0 0.0
    %v969 = vand.u32 %v304, 4294901760
    %970 = vmatpush1.msra.mxu0 %v969
    %971 = vmatprep.subr.mxu0 0.0
    %v972 = vand.u32 %v305, 4294901760
    %973 = vmatpush1.msra.mxu0 %v972
    %974 = vmatprep.subr.mxu0 0.0
    %v975 = vand.u32 %v306, 4294901760
    %976 = vmatpush1.msra.mxu0 %v975
    %977 = vmatprep.subr.mxu0 0.0
    %978 = vmatpush1.msra.mxu0 0.0
    %979 = vmatprep.subr.mxu0 0.0
    %980 = vmatpush1.msra.mxu0 0.0
    %981 = vmatprep.subr.mxu0 0.0
    %982 = vmatpush1.msra.mxu0 0.0
    %983 = vmatprep.subr.mxu0 0.0
    %984 = vmatpush1.msra.mxu0 0.0
    %985 = vmatprep.subr.mxu0 0.0
    %986 = vmatpush1.msra.mxu0 0.0
    %987 = vmatprep.subr.mxu0 0.0
    %988 = vmatpush1.msra.mxu0 0.0
    %989 = vmatprep.subr.mxu0 0.0
    %990 = vmatpush1.msra.mxu0 0.0
    %991 = vmatprep.subr.mxu0 0.0
    %992 = vmatpush1.msra.mxu0 0.0
    %993 = vmatprep.subr.mxu0 0.0
    %994 = vmatpush1.msra.mxu0 0.0
    %995 = vmatprep.subr.mxu0 0.0
    %996 = vmatpush1.msra.mxu0 0.0
    %997 = vmatprep.subr.mxu0 0.0
    %998 = vmatpush1.msra.mxu0 0.0
    %999 = vmatprep.subr.mxu0 0.0
    %1000 = vmatpush1.msra.mxu0 0.0
    %1001 = vmatprep.subr.mxu0 0.0
    %1002 = vmatpush1.msra.mxu0 0.0
    %1003 = vmatprep.subr.mxu0 0.0
    %1004 = vmatpush1.msra.mxu0 0.0
    %1005 = vmatprep.subr.mxu0 0.0
    %1006 = vmatpush1.msra.mxu0 0.0
    %1007 = vmatprep.subr.mxu0 0.0
    %1008 = vmatpush1.msra.mxu0 0.0
    %1009 = vmatprep.mubr.f32.mxu0 0.0
    %v1010 = vand.u32 %v332, 4294901760
    %1011 = vmatmul.mubr.f32.gmra.mrb[0].mxu0 %v1010
    %v1012 = vpop.f32.mrb[0].mxu0
    %v1013 = vadd.f32 %v920, %v1012
    %v1014 = vpop.f32.mrb[0].mxu0
    %1015 = vmatprep.mubr.f32.mxu0 0.0
    %v1016 = vand.u32 %v335, 4294901760
    %1017 = vmatmul.mubr.f32.gmra.mrb[0].mxu0 %v1016
    %v1018 = vpop.f32.mrb[0].mxu0
    %v1019 = vadd.f32 %v926, %v1018
    %v1020 = vpop.f32.mrb[0].mxu0
    %1021 = vdwg.mxu0
    %v1022 = vmul.f32 %v1013, 0.00024414063
    %v1023 = vmul.f32 %v1019, 0.00024414063
    %v1024 = vsub.f32 %v1022, 0.6
    %v1025 = vsub.f32 %v1023, 0.6
    %v1026 = vmul.f32 %v1024, %v1024
    %v1027 = vmul.f32 %v1025, %v1025
    %v1028 = vlaneseq
    %v1029 = vand.u32 %v1028, 127
    %vm1030 = vcmp.lt.s32.totalorder %v1029, 2
    %v1031 = vsel %vm1030, %v1026, 0.0
    %v1032 = vsel %vm1030, %v1027, 0.0
    %1033 = vst [vmem:[%s2] sm:$0xff] %v1031
    %1034 = vst [vmem:[%s2 + $0x8] sm:$0xf] %v1032
    // Predicated region
    $region18: #{tpu_custom_call.1} parent=1 // pred_check
      _
    $region19: #{tpu_custom_call.1} parent=1 // pred_check_branch
      %1036 = sbr.rel (0) target = $region21
    $region20: #{tpu_custom_call.1} parent=1 // pred_region
      _
    $region21: #{tpu_custom_call.1} parent=1 // pred_fallthru
      _
    // Predicated region
    $region22: #{tpu_custom_call.1} parent=1 // pred_check
      _
    $region23: #{tpu_custom_call.1} parent=1 // pred_check_branch
      %1038 = sbr.rel (0) target = $region25
    $region24: #{tpu_custom_call.1} parent=1 // pred_region
      _
    $region25: #{tpu_custom_call.1} parent=1 // pred_fallthru
      _
    %1039 = vsyncpa [#allocation3], 1
    %1040 = vsyncpa [#allocation5], 1

</llo_original>
